<compile_context>
chip_gen: v5e
topology: v5e:2x2
jax: 0.10.0
libtpu: 0.0.40
codegen_flags: <defaults>
</compile_context>

<pallas_src>
import functools

import jax
import jax.numpy as jnp
from jax import lax
from jax.experimental import pallas as pl
from jax.experimental.pallas import tpu as pltpu


def _attention_math(x_blk, y_blk, z_blk, w, b, *, x_heads, x_dim, y_dim, z_dim,
                    hd, y_out, z_out, mxu_dtype, use_approx_recip):
    """Forward math for a block of G independent problems.

    x_blk: (G, Nx, x_dim), y_blk: (G, Ny, y_dim), z_blk: (G, Nz, z_dim), f32.
    w: packed weights (hd + y_out + z_out, max_in)  rows = [Wq | Wk | Wv].
    b: packed biases  (3, max_out)                  rows = [bq | bk | bv].
    Returns (G, Nz, y_out) float32.

    Shared verbatim between the Pallas kernel body and the pure-JAX
    matched-precision reference (only the reciprocal flag differs).
    """
    g, nx, _ = x_blk.shape
    ny = y_blk.shape[1]
    nz = z_blk.shape[1]
    c = mxu_dtype                      # MXU operand dtype; accumulate in f32.

    # ---- unpack params (static slices of the packed operands) ----
    wq = w[0:hd, 0:x_dim]
    wk = w[hd:hd + y_out, 0:y_dim]
    wv = w[hd + y_out:hd + y_out + z_out, 0:z_dim]
    bq = b[0:1, 0:hd]
    bk = b[1:2, 0:y_out]
    bv = b[2:3, 0:z_out]

    # ---- linear projections: ONE matmul each for the whole problem block
    #      (PyTorch nn.Linear: out = in @ W.T + bias) ----
    x2 = x_blk.reshape(g * nx, x_dim)
    y2 = y_blk.reshape(g * ny, y_dim)
    z2 = z_blk.reshape(g * nz, z_dim)
    q2 = lax.dot_general(x2.astype(c), wq.astype(c), (((1,), (1,)), ((), ())),
                         preferred_element_type=jnp.float32) + bq
    k2 = lax.dot_general(y2.astype(c), wk.astype(c), (((1,), (1,)), ((), ())),
                         preferred_element_type=jnp.float32) + bk
    v2 = lax.dot_general(z2.astype(c), wv.astype(c), (((1,), (1,)), ((), ())),
                         preferred_element_type=jnp.float32) + bv

    ny_h = nx // x_heads               # rows per head (== Ny, torch constraint)
    g2 = g * x_heads

    # ---- torch `.view(h, Ny, hd).transpose(1, 2)` for all heads & problems at
    #      once: MXU transpose via a broadcast identity, expressed in the
    #      "contract last dim of both operands" batched-einsum form (the same
    #      form flash-attention uses for q @ k^T). ----
    q3 = q2.reshape(g2, ny_h, hd)                               # (G*h, Ny, hd)
    eye = (lax.broadcasted_iota(jnp.int32, (hd, hd), 0) ==
           lax.broadcasted_iota(jnp.int32, (hd, hd), 1)).astype(c)
    eye_b = jnp.broadcast_to(eye[None, :, :], (g2, hd, hd))
    q_t = jnp.einsum('gdk,gik->gdi', eye_b, q3.astype(c),
                     preferred_element_type=jnp.float32)        # (G*h, hd, Ny)
    qhat = q_t.reshape(g, x_heads * hd, ny_h)                   # (G, x_dim, Ny)

    # ---- scores: ONE batched matmul for the full (x_dim, y_out) block ----
    k3 = k2.reshape(g, ny, y_out)
    s = jnp.einsum('gxn,gny->gxy', qhat.astype(c), k3.astype(c),
                   preferred_element_type=jnp.float32)          # (G, x_dim, y_out)

    # ---- single-pass row-wise softmax in f32 (matches F.softmax(dim=-1) on
    #      the flattened (x_heads*hd, y_out) view; no 1/sqrt(hd) scale, exactly
    #      as in the torch module). ----
    m = jnp.max(s, axis=-1, keepdims=True)
    e = jnp.exp(s - m)
    denom = jnp.sum(e, axis=-1, keepdims=True)
    if use_approx_recip:
        p = e * pl.reciprocal(denom, approx=True)    # EUP divide, off the VALU
    else:
        p = e / denom

    # ---- attention output: ONE batched matmul  v @ P ----
    v3 = v2.reshape(g, nz, z_dim)
    o3 = jnp.einsum('gnk,gky->gny', v3.astype(c), p.astype(c),
                    preferred_element_type=jnp.float32)         # (G, Nz, y_out)
    return o3


def _mha_kernel(x_ref, y_ref, z_ref, w_ref, b_ref, out_ref, **static):
    o3 = _attention_math(x_ref[...], y_ref[...], z_ref[...], w_ref[...],
                         b_ref[...], use_approx_recip=True, **static)
    # Lane-dense store: lay the block's problems side-by-side along lanes so
    # the out BlockSpec's last dim is a multiple of 128 (unmasked vst).
    g = o3.shape[0]
    out_ref[...] = jnp.concatenate([o3[i] for i in range(g)],
                                   axis=-1).astype(out_ref.dtype)


def _pack_params(params):
    """Pack (wq, bq, wk, bk, wv, bv) into two operands (fewer DMA descriptors)."""
    wq, bq, wk, bk, wv, bv = params
    hd, y_out, z_out = wq.shape[0], wk.shape[0], wv.shape[0]
    in_max = max(wq.shape[1], wk.shape[1], wv.shape[1])
    out_max = max(hd, y_out, z_out)
    pad_cols = lambda a: jnp.pad(a, ((0, 0), (0, in_max - a.shape[1])))
    w_packed = jnp.concatenate([pad_cols(wq), pad_cols(wk), pad_cols(wv)], axis=0)
    pad_vec = lambda a: jnp.pad(a.reshape(-1), (0, out_max - a.shape[-1]))
    b_packed = jnp.stack([pad_vec(bq), pad_vec(bk), pad_vec(bv)], axis=0)
    return w_packed, b_packed


def multi_head_attention(x, y, z, params, *, x_heads, y_heads, z_heads,
                         block_b=None, mxu_dtype=jnp.bfloat16):
    """Batched MultiHeadAttention forward.

    x: (B, Nx, x_dim), y: (B, Ny, y_dim), z: (B, Nz, z_dim) — B independent
    problems, each evaluated exactly like the PyTorch module's forward.
    params = (wq, bq, wk, bk, wv, bv) in PyTorch nn.Linear layout
    (W: (out_features, in_features), b: (out_features,)).
    Returns (B, Nz, y_out) float32.
    """
    assert y_heads == 1 and z_heads == 1, (
        "torch .view() in the reference module is only shape-valid for "
        "y_heads == z_heads == 1")
    wq, bq, wk, bk, wv, bv = params
    B, nx, x_dim = x.shape
    _, ny, y_dim = y.shape
    _, nz, z_dim = z.shape
    hd, y_out, z_out = wq.shape[0], wk.shape[0], wv.shape[0]
    assert x_dim % x_heads == 0 and hd == x_dim // x_heads
    assert nx % x_heads == 0 and ny == nx // x_heads, \
        "matmul(query, key) requires Ny == Nx // x_heads"
    assert z_dim == x_dim, "matmul(value, attn_probs) requires z_dim == x_dim"

    # Problems per grid step: chosen so the output block's last dim is a
    # multiple of 128 lanes (dense, unmasked stores) whenever possible.
    if block_b is None:
        block_b = B
        if y_out < 128 and 128 % y_out == 0 and B % (128 // y_out) == 0:
            block_b = 128 // y_out
    assert B % block_b == 0, "batch must be divisible by block_b"
    grid_b = B // block_b

    w_packed, b_packed = _pack_params(params)

    static = dict(x_heads=x_heads, x_dim=x_dim, y_dim=y_dim, z_dim=z_dim,
                  hd=hd, y_out=y_out, z_out=z_out, mxu_dtype=mxu_dtype)
    kernel = functools.partial(_mha_kernel, **static)

    flops_per_problem = 2 * (nx * x_dim * hd        # q projection
                             + ny * y_dim * y_out   # k projection
                             + nz * z_dim * z_out   # v projection
                             + x_dim * ny * y_out   # scores
                             + nz * x_dim * y_out)  # v @ P
    cost = pl.CostEstimate(
        flops=int(B * flops_per_problem),
        transcendentals=int(B * x_dim * y_out),
        bytes_accessed=int(4 * (x.size + y.size + z.size + w_packed.size
                                + b_packed.size + B * nz * y_out)))

    out_cols = pl.pallas_call(
        kernel,
        out_shape=jax.ShapeDtypeStruct((nz, B * y_out), jnp.float32),
        grid=(grid_b,),
        in_specs=[
            pl.BlockSpec((block_b, nx, x_dim), lambda i: (i, 0, 0)),
            pl.BlockSpec((block_b, ny, y_dim), lambda i: (i, 0, 0)),
            pl.BlockSpec((block_b, nz, z_dim), lambda i: (i, 0, 0)),
            # Params: same block every grid step -> DMA'd once, VMEM-resident.
            pl.BlockSpec(w_packed.shape, lambda i: (0, 0)),
            pl.BlockSpec(b_packed.shape, lambda i: (0, 0)),
        ],
        out_specs=pl.BlockSpec((nz, block_b * y_out), lambda i: (0, i)),
        compiler_params=pltpu.CompilerParams(
            # Batch axis is embarrassingly parallel -> lets v7x's 2 TensorCores
            # split the grid; harmless on single-TC v5e/v6e.
            dimension_semantics=("parallel",)),
        cost_estimate=cost,
    )(x, y, z, w_packed, b_packed)

    # Layout plumbing only (outside the kernel): column-packed (Nz, B*y_out)
    # back to the natural (B, Nz, y_out).
    return out_cols.reshape(nz, B, y_out).transpose(1, 0, 2)


def reference_f32(x, y, z, params, *, x_heads, y_heads, z_heads):
    """Direct float32 transcription of the PyTorch forward, vmapped over B."""
    wq, bq, wk, bk, wv, bv = params

    def one(xb, yb, zb):
        q = xb @ wq.T + bq
        k = yb @ wk.T + bk
        v = zb @ wv.T + bv
        hd = wq.shape[0]
        q = q.reshape(x_heads, xb.shape[0] // x_heads, hd).transpose(0, 2, 1)
        k = k.reshape(y_heads, yb.shape[0] // y_heads, yb.shape[1] // y_heads)
        v = v.reshape(z_heads, zb.shape[0] // z_heads, zb.shape[1] // z_heads)
        scores = jnp.matmul(q, k)
        probs = jax.nn.softmax(
            scores.reshape(scores.shape[0] * scores.shape[1], -1), axis=-1)
        return jnp.squeeze(jnp.matmul(v, probs), axis=0)

    return jax.vmap(one)(x, y, z)


if __name__ == "__main__":
    # Module config (exercises the multi-head query path).
    x_dim = y_dim = z_dim = 32
    x_heads, y_heads, z_heads = 2, 1, 1
    hd = x_dim // x_heads            # 16
    Nx = 16
    Ny = Nx // x_heads               # 8
    Nz = 8
    B = 8                            # independent problems behind one grid

    key = jax.random.PRNGKey(0)
    ks = jax.random.split(key, 9)
    x = jax.random.normal(ks[0], (B, Nx, x_dim), jnp.float32)
    y = jax.random.normal(ks[1], (B, Ny, y_dim), jnp.float32)
    z = jax.random.normal(ks[2], (B, Nz, z_dim), jnp.float32)

    # PyTorch nn.Linear parameter layout: W = (out_features, in_features).
    wq = 0.1 * jax.random.normal(ks[3], (hd, x_dim), jnp.float32)
    bq = 0.1 * jax.random.normal(ks[4], (hd,), jnp.float32)
    wk = 0.1 * jax.random.normal(ks[5], (y_dim, y_dim), jnp.float32)
    bk = 0.1 * jax.random.normal(ks[6], (y_dim,), jnp.float32)
    wv = 0.1 * jax.random.normal(ks[7], (z_dim, z_dim), jnp.float32)
    bv = 0.1 * jax.random.normal(ks[8], (z_dim,), jnp.float32)
    params = (wq, bq, wk, bk, wv, bv)

    out = multi_head_attention(x, y, z, params, x_heads=x_heads,
                               y_heads=y_heads, z_heads=z_heads)
    out = jax.block_until_ready(out)
    assert out.shape == (B, Nz, y_dim), out.shape

    # (1) Matched-precision reference: identical math in pure JAX (same bf16
    #     MXU operands, f32 accumulation); the only intentional difference vs
    #     the kernel is the approximate EUP reciprocal in the softmax.
    w_packed, b_packed = _pack_params(params)
    ref_matched = _attention_math(
        x, y, z, w_packed, b_packed, x_heads=x_heads, x_dim=x_dim, y_dim=y_dim,
        z_dim=z_dim, hd=hd, y_out=y_dim, z_out=z_dim,
        mxu_dtype=jnp.bfloat16, use_approx_recip=False)
    ref_matched = jax.block_until_ready(ref_matched)
    err_matched = float(jnp.max(jnp.abs(out - ref_matched)))
    assert err_matched < 5e-3, f"mismatch vs matched-precision reference: {err_matched}"

    # (2) Full-f32 transcription of the torch forward (semantic sanity check;
    #     looser tolerance covers the intentional bf16 MXU-operand rounding).
    ref = reference_f32(x, y, z, params, x_heads=x_heads, y_heads=y_heads,
                        z_heads=z_heads)
    ref = jax.block_until_ready(ref)
    err_f32 = float(jnp.max(jnp.abs(out - ref)))
    assert err_f32 < 5e-2, f"mismatch vs float32 reference: {err_f32}"

    print("KERNEL_OK")
</pallas_src>

<mosaic_0001>
module attributes {stable_mosaic.version = 11 : i64} {
  func.func @_mha_kernel(%arg0: i32, %arg1: memref<4x16x32xf32, #tpu.memory_space<vmem>>, %arg2: memref<4x8x32xf32, #tpu.memory_space<vmem>>, %arg3: memref<4x8x32xf32, #tpu.memory_space<vmem>>, %arg4: memref<80x32xf32, #tpu.memory_space<vmem>>, %arg5: memref<3x32xf32, #tpu.memory_space<vmem>>, %arg6: memref<8x128xf32, #tpu.memory_space<vmem>>) attributes {dimension_semantics = [#tpu.dimension_semantics<parallel>], iteration_bounds = array<i64: 2>, scalar_prefetch = 0 : i64, scratch_operands = 0 : i64, tpu.core_type = #tpu.core_type<tc>, window_params = [{transform_indices = @transform_0, window_bounds = array<i64: 4, 16, 32>}, {transform_indices = @transform_1, window_bounds = array<i64: 4, 8, 32>}, {transform_indices = @transform_2, window_bounds = array<i64: 4, 8, 32>}, {pipeline_mode = #tpu.pipeline_mode<synchronous>, transform_indices = @transform_3, window_bounds = array<i64: 80, 32>}, {pipeline_mode = #tpu.pipeline_mode<synchronous>, transform_indices = @transform_4, window_bounds = array<i64: 3, 32>}, {transform_indices = @transform_5, window_bounds = array<i64: 8, 128>}]} {
    %c0 = arith.constant 0 : index
    %c0_0 = arith.constant 0 : index
    %c0_1 = arith.constant 0 : index
    %0 = vector.load %arg1[%c0, %c0_0, %c0_1] : memref<4x16x32xf32, #tpu.memory_space<vmem>>, vector<4x16x32xf32>
    %c0_2 = arith.constant 0 : index
    %c0_3 = arith.constant 0 : index
    %c0_4 = arith.constant 0 : index
    %1 = vector.load %arg2[%c0_2, %c0_3, %c0_4] : memref<4x8x32xf32, #tpu.memory_space<vmem>>, vector<4x8x32xf32>
    %c0_5 = arith.constant 0 : index
    %c0_6 = arith.constant 0 : index
    %c0_7 = arith.constant 0 : index
    %2 = vector.load %arg3[%c0_5, %c0_6, %c0_7] : memref<4x8x32xf32, #tpu.memory_space<vmem>>, vector<4x8x32xf32>
    %c0_8 = arith.constant 0 : index
    %c0_9 = arith.constant 0 : index
    %3 = vector.load %arg4[%c0_8, %c0_9] : memref<80x32xf32, #tpu.memory_space<vmem>>, vector<80x32xf32>
    %c0_10 = arith.constant 0 : index
    %c0_11 = arith.constant 0 : index
    %4 = vector.load %arg5[%c0_10, %c0_11] : memref<3x32xf32, #tpu.memory_space<vmem>>, vector<3x32xf32>
    %5 = vector.extract_strided_slice %3 {offsets = [0, 0], sizes = [16, 32], strides = [1, 1]} : vector<80x32xf32> to vector<16x32xf32>
    %6 = vector.extract_strided_slice %3 {offsets = [16, 0], sizes = [32, 32], strides = [1, 1]} : vector<80x32xf32> to vector<32x32xf32>
    %7 = vector.extract_strided_slice %3 {offsets = [48, 0], sizes = [32, 32], strides = [1, 1]} : vector<80x32xf32> to vector<32x32xf32>
    %8 = vector.extract_strided_slice %4 {offsets = [0, 0], sizes = [1, 16], strides = [1, 1]} : vector<3x32xf32> to vector<1x16xf32>
    %9 = vector.extract_strided_slice %4 {offsets = [1, 0], sizes = [1, 32], strides = [1, 1]} : vector<3x32xf32> to vector<1x32xf32>
    %10 = vector.extract_strided_slice %4 {offsets = [2, 0], sizes = [1, 32], strides = [1, 1]} : vector<3x32xf32> to vector<1x32xf32>
    %11 = vector.shape_cast %0 : vector<4x16x32xf32> to vector<64x32xf32>
    %12 = vector.shape_cast %1 : vector<4x8x32xf32> to vector<32x32xf32>
    %13 = vector.shape_cast %2 : vector<4x8x32xf32> to vector<32x32xf32>
    %14 = arith.truncf %11 : vector<64x32xf32> to vector<64x32xbf16>
    %15 = arith.truncf %5 : vector<16x32xf32> to vector<16x32xbf16>
    %cst = arith.constant dense<0.000000e+00> : vector<64x16xf32>
    %16 = tpu.matmul %14, %15, %cst {dimension_numbers = #tpu.dot_dimension_numbers<[1], [1], [0], [0], [0, 0, 1, 0], [], []>} : vector<64x32xbf16>, vector<16x32xbf16>, vector<64x16xf32> -> vector<64x16xf32>
    %17 = vector.broadcast %8 : vector<1x16xf32> to vector<64x16xf32>
    %18 = arith.addf %16, %17 : vector<64x16xf32>
    %19 = arith.truncf %12 : vector<32x32xf32> to vector<32x32xbf16>
    %20 = arith.truncf %6 : vector<32x32xf32> to vector<32x32xbf16>
    %cst_12 = arith.constant dense<0.000000e+00> : vector<32x32xf32>
    %21 = tpu.matmul %19, %20, %cst_12 {dimension_numbers = #tpu.dot_dimension_numbers<[1], [1], [0], [0], [0, 0, 1, 0], [], []>} : vector<32x32xbf16>, vector<32x32xbf16>, vector<32x32xf32> -> vector<32x32xf32>
    %22 = vector.broadcast %9 : vector<1x32xf32> to vector<32x32xf32>
    %23 = arith.addf %21, %22 : vector<32x32xf32>
    %24 = arith.truncf %13 : vector<32x32xf32> to vector<32x32xbf16>
    %25 = arith.truncf %7 : vector<32x32xf32> to vector<32x32xbf16>
    %cst_13 = arith.constant dense<0.000000e+00> : vector<32x32xf32>
    %26 = tpu.matmul %24, %25, %cst_13 {dimension_numbers = #tpu.dot_dimension_numbers<[1], [1], [0], [0], [0, 0, 1, 0], [], []>} : vector<32x32xbf16>, vector<32x32xbf16>, vector<32x32xf32> -> vector<32x32xf32>
    %27 = vector.broadcast %10 : vector<1x32xf32> to vector<32x32xf32>
    %28 = arith.addf %26, %27 : vector<32x32xf32>
    %29 = vector.shape_cast %18 : vector<64x16xf32> to vector<8x8x16xf32>
    %30 = tpu.iota {dimensions = array<i32: 0>} : vector<16x16xi32>
    %31 = tpu.iota {dimensions = array<i32: 1>} : vector<16x16xi32>
    %32 = arith.cmpi eq, %30, %31 : vector<16x16xi32>
    %33 = arith.extui %32 : vector<16x16xi1> to vector<16x16xi32>
    %34 = arith.sitofp %33 : vector<16x16xi32> to vector<16x16xf32>
    %35 = arith.truncf %34 : vector<16x16xf32> to vector<16x16xbf16>
    %36 = vector.shape_cast %35 : vector<16x16xbf16> to vector<1x16x16xbf16>
    %37 = vector.shape_cast %36 : vector<1x16x16xbf16> to vector<1x16x16xbf16>
    %38 = vector.broadcast %37 : vector<1x16x16xbf16> to vector<8x16x16xbf16>
    %39 = arith.truncf %29 : vector<8x8x16xf32> to vector<8x8x16xbf16>
    "tpu.trace_start"() <{level = 10 : i32, message = "gdk,gik->gdi"}> : () -> ()
    %cst_14 = arith.constant dense<0.000000e+00> : vector<8x16x8xf32>
    %40 = tpu.matmul %38, %39, %cst_14 {dimension_numbers = #tpu.dot_dimension_numbers<[2], [2], [1], [1], [0, 0, 0, 1, 1, 1], [0], [0]>} : vector<8x16x16xbf16>, vector<8x8x16xbf16>, vector<8x16x8xf32> -> vector<8x16x8xf32>
    "tpu.trace_stop"() : () -> ()
    %41 = vector.shape_cast %40 : vector<8x16x8xf32> to vector<4x32x8xf32>
    %42 = vector.shape_cast %23 : vector<32x32xf32> to vector<4x8x32xf32>
    %43 = arith.truncf %41 : vector<4x32x8xf32> to vector<4x32x8xbf16>
    %44 = arith.truncf %42 : vector<4x8x32xf32> to vector<4x8x32xbf16>
    "tpu.trace_start"() <{level = 10 : i32, message = "gxn,gny->gxy"}> : () -> ()
    %cst_15 = arith.constant dense<0.000000e+00> : vector<4x32x32xf32>
    %45 = tpu.matmul %43, %44, %cst_15 {dimension_numbers = #tpu.dot_dimension_numbers<[2], [1], [1], [2], [0, 0, 0, 1, 1, 2], [0], [0]>} : vector<4x32x8xbf16>, vector<4x8x32xbf16>, vector<4x32x32xf32> -> vector<4x32x32xf32>
    "tpu.trace_stop"() : () -> ()
    %cst_16 = arith.constant dense<0xFF800000> : vector<4x32xf32>
    %46 = vector.multi_reduction <maximumf>, %45, %cst_16 [2] : vector<4x32x32xf32> to vector<4x32xf32>
    %47 = vector.shape_cast %46 : vector<4x32xf32> to vector<4x32x1xf32>
    %48 = vector.broadcast %47 : vector<4x32x1xf32> to vector<4x32x32xf32>
    %49 = arith.subf %45, %48 : vector<4x32x32xf32>
    %50 = math.exp %49 : vector<4x32x32xf32>
    %cst_17 = arith.constant dense<0.000000e+00> : vector<4x32xf32>
    %51 = vector.multi_reduction <add>, %50, %cst_17 [2] : vector<4x32x32xf32> to vector<4x32xf32>
    %52 = vector.shape_cast %51 : vector<4x32xf32> to vector<4x32x1xf32>
    %53 = tpu.reciprocal %52 {approx = true} : vector<4x32x1xf32> -> vector<4x32x1xf32>
    %54 = vector.broadcast %53 : vector<4x32x1xf32> to vector<4x32x32xf32>
    %55 = arith.mulf %50, %54 : vector<4x32x32xf32>
    %56 = vector.shape_cast %28 : vector<32x32xf32> to vector<4x8x32xf32>
    %57 = arith.truncf %56 : vector<4x8x32xf32> to vector<4x8x32xbf16>
    %58 = arith.truncf %55 : vector<4x32x32xf32> to vector<4x32x32xbf16>
    "tpu.trace_start"() <{level = 10 : i32, message = "gnk,gky->gny"}> : () -> ()
    %cst_18 = arith.constant dense<0.000000e+00> : vector<4x8x32xf32>
    %59 = tpu.matmul %57, %58, %cst_18 {dimension_numbers = #tpu.dot_dimension_numbers<[2], [1], [1], [2], [0, 0, 0, 1, 1, 2], [0], [0]>} : vector<4x8x32xbf16>, vector<4x32x32xbf16>, vector<4x8x32xf32> -> vector<4x8x32xf32>
    "tpu.trace_stop"() : () -> ()
    %60 = vector.extract_strided_slice %59 {offsets = [0, 0, 0], sizes = [1, 8, 32], strides = [1, 1, 1]} : vector<4x8x32xf32> to vector<1x8x32xf32>
    %61 = vector.shape_cast %60 : vector<1x8x32xf32> to vector<8x32xf32>
    %62 = vector.extract_strided_slice %59 {offsets = [1, 0, 0], sizes = [1, 8, 32], strides = [1, 1, 1]} : vector<4x8x32xf32> to vector<1x8x32xf32>
    %63 = vector.shape_cast %62 : vector<1x8x32xf32> to vector<8x32xf32>
    %64 = vector.extract_strided_slice %59 {offsets = [2, 0, 0], sizes = [1, 8, 32], strides = [1, 1, 1]} : vector<4x8x32xf32> to vector<1x8x32xf32>
    %65 = vector.shape_cast %64 : vector<1x8x32xf32> to vector<8x32xf32>
    %66 = vector.extract_strided_slice %59 {offsets = [3, 0, 0], sizes = [1, 8, 32], strides = [1, 1, 1]} : vector<4x8x32xf32> to vector<1x8x32xf32>
    %67 = vector.shape_cast %66 : vector<1x8x32xf32> to vector<8x32xf32>
    %68 = tpu.concatenate %61, %63, %65, %67 in 1 : vector<8x32xf32>, vector<8x32xf32>, vector<8x32xf32>, vector<8x32xf32> -> vector<8x128xf32>
    %c0_19 = arith.constant 0 : index
    %c0_20 = arith.constant 0 : index
    %69 = vector.load %arg6[%c0_19, %c0_20] : memref<8x128xf32, #tpu.memory_space<vmem>>, vector<8x128xf32>
    tpu.vector_store %arg6[%c0_19, %c0_20], %68 {strides = array<i32>} : memref<8x128xf32, #tpu.memory_space<vmem>>, vector<8x128xf32>,
    return
  }
  func.func @transform_0(%arg0: i32) -> (i32, i32, i32) {
    %c0_i32 = arith.constant 0 : i32
    %c0_i32_0 = arith.constant 0 : i32
    %c0_i32_1 = arith.constant 0 : i32
    return %arg0, %c0_i32, %c0_i32_0 : i32, i32, i32
  }
  func.func @transform_1(%arg0: i32) -> (i32, i32, i32) {
    %c0_i32 = arith.constant 0 : i32
    %c0_i32_0 = arith.constant 0 : i32
    %c0_i32_1 = arith.constant 0 : i32
    return %arg0, %c0_i32, %c0_i32_0 : i32, i32, i32
  }
  func.func @transform_2(%arg0: i32) -> (i32, i32, i32) {
    %c0_i32 = arith.constant 0 : i32
    %c0_i32_0 = arith.constant 0 : i32
    %c0_i32_1 = arith.constant 0 : i32
    return %arg0, %c0_i32, %c0_i32_0 : i32, i32, i32
  }
  func.func @transform_3(%arg0: i32) -> (i32, i32) {
    %c0_i32 = arith.constant 0 : i32
    %c0_i32_0 = arith.constant 0 : i32
    %c0_i32_1 = arith.constant 0 : i32
    return %c0_i32, %c0_i32_0 : i32, i32
  }
  func.func @transform_4(%arg0: i32) -> (i32, i32) {
    %c0_i32 = arith.constant 0 : i32
    %c0_i32_0 = arith.constant 0 : i32
    %c0_i32_1 = arith.constant 0 : i32
    return %c0_i32, %c0_i32_0 : i32, i32
  }
  func.func @transform_5(%arg0: i32) -> (i32, i32) {
    %c0_i32 = arith.constant 0 : i32
    %c0_i32_0 = arith.constant 0 : i32
    return %c0_i32, %arg0 : i32, i32
  }
}

</mosaic_0001>

<llo_original>
// kernel: tpu_custom_call.1
$region0: #{tpu_custom_call.1}
  #allocation0 [shape = 'u32[]', space=smem, size = 0x4, offset = 0x4, fixed_abs, tag = 'smem constant byte address 0x4 - core index']
  #allocation1 [shape = 'u32[72,128]{1,0:T(1,128)}', space=vmem, size = 0x9000, scoped, tag = 'internal scratch']
  %s0 = inlined_call_operand.hbm [shape: f32[8,16,32], index: 0, kind: input, shape index: {}]
  %s1 = inlined_call_operand.vmem [shape: f32[8,8,32], index: 1, kind: input, shape index: {}]
  %s2 = inlined_call_operand.hbm [shape: f32[8,8,32], index: 2, kind: input, shape index: {}]
  %s3 = inlined_call_operand.vmem [shape: f32[80,32], index: 3, kind: input, shape index: {}]
  %s4 = inlined_call_operand.vmem [shape: f32[3,32], index: 4, kind: input, shape index: {}]
  %s5 = inlined_call_operand.hbm [shape: f32[8,256], index: 5, kind: output, shape index: {}]
  %s6 = sld [smem:[#allocation0]]
  $region61: #{tpu_custom_call.1} parent=0
    _
  %s8 = ssub.s32 1, %s6
  %s9 = scalar_select 0, %s8, %s6
  $region1: #{tpu_custom_call.1} parent=0
    #allocation2 [shape = 'u8[65536]{0}', space=vmem, size = 0x10000, scoped, tag = 'input window, operand 0']
    #allocation3 [shape = 's32[2]{0}', space=sflag, size = 0x8, scoped, tag = 'scoped memory for tpu_custom_call.1']
    #allocation4 [shape = 's32[2]{0}', space=sflag, size = 0x8, scoped, tag = 'scoped memory for tpu_custom_call.1']
    #allocation5 [shape = 'u8[32768]{0}', space=vmem, size = 0x8000, scoped, tag = 'input window, operand 2']
    #allocation6 [shape = 's32[2]{0}', space=sflag, size = 0x8, scoped, tag = 'scoped memory for tpu_custom_call.1']
    #allocation7 [shape = 'u8[8192]{0}', space=vmem, size = 0x2000, scoped, tag = 'output window, operand 0']
    %10 = vsyncpa [#allocation3], 0
    %s11 = scalar_lea.sflag [#allocation3], 1
    %12 = vsyncpa %s11, 0
    %13 = vsyncpa [#allocation6], 0
    %s14 = scalar_lea.sflag [#allocation6], 1
    %15 = vsyncpa %s14, 0
    %16 = vsyncpa [#allocation4], 0
    %s17 = scalar_lea.sflag [#allocation4], 1
    %18 = vsyncpa %s17, 0
    loop: start=0, step=1, limit=4
    $region2: #{tpu_custom_call.1} parent=1 // loop_pre_header
      _
    $region3: #{tpu_custom_call.1} parent=1 // loop_header
      %s20 = sphi 0, %s24
      %p21 = scmp.ge.s32.totalorder %s20, 4
      %s30 = sphi 0, %s32
      %s33 = sphi 0, %s30
      %s34 = sphi 0, %s33
      %s50 = sphi 0, %s34
      %s56 = sphi 0, %s58
      %s59 = sphi 0, %s56
      %s60 = sphi 0, %s59
      %s76 = sphi 0, %s60
      %s82 = sphi 0, %s84
      %s85 = sphi 0, %s82
      %s86 = sphi 0, %s85
      %s102 = sphi 0, %s86
      %s106 = sphi 0, %s106
      %s108 = sphi 0, %s106
      %s109 = sphi 0, %s108
      %s123 = sphi 0, %s109
      %s127 = sphi 0, %s127
      %s129 = sphi 0, %s127
      %s130 = sphi 0, %s129
      %s144 = sphi 0, %s130
      %s150 = sphi 0, %s152
      %s153 = sphi 0, %s150
      %s154 = sphi 0, %s153
      %s170 = sphi 0, %s154
    $region4: #{tpu_custom_call.1} parent=1 // loop_header_branch
      %23 = sbr.rel (%p21) target = $region8
    $region5: #{tpu_custom_call.1} parent=1 // loop_body
      %s25 = ssub.s32 %s20, 1
      %s26 = ssub.s32 %s20, 2
      %s27 = sadd.s32 %s20, 1
      %s28 = ssub.s32 %s20, %s27
      %p29 = scmp.eq.s32.totalorder %s28, 0
      %s31 = sadd.s32 %s30, 1
      %s32 = scalar_select %p29, %s30, %s31
      %p35 = pneg %p29
      %p36 = scmp.eq.s32.totalorder %s20, 1
      %p37 = por %p35, %p36
      %p38 = scmp.ne.s32.totalorder %s30, %s33
      %p39 = scmp.eq.s32.totalorder %s20, 0
      %p40 = por %p38, %p39
      %p41 = scmp.ne.s32.totalorder %s30, %s33
      %p42 = scmp.eq.s32.totalorder %s25, 1
      %p43 = por %p41, %p42
      %p44 = scmp.ne.s32.totalorder %s33, %s34
      %p45 = scmp.eq.s32.totalorder %s25, 0
      %p46 = por %p44, %p45
      %p47 = scmp.ne.s32.totalorder %s33, %s34
      %p48 = scmp.eq.s32.totalorder %s26, 1
      %p49 = por %p47, %p48
      %p51 = scmp.ne.s32.totalorder %s34, %s50
      %p52 = scmp.eq.s32.totalorder %s26, 0
      %p53 = por %p51, %p52
      %s54 = ssub.s32 %s20, %s27
      %p55 = scmp.eq.s32.totalorder %s54, 0
      %s57 = sadd.s32 %s56, 1
      %s58 = scalar_select %p55, %s56, %s57
      %p61 = pneg %p55
      %p62 = scmp.eq.s32.totalorder %s20, 1
      %p63 = por %p61, %p62
      %p64 = scmp.ne.s32.totalorder %s56, %s59
      %p65 = scmp.eq.s32.totalorder %s20, 0
      %p66 = por %p64, %p65
      %p67 = scmp.ne.s32.totalorder %s56, %s59
      %p68 = scmp.eq.s32.totalorder %s25, 1
      %p69 = por %p67, %p68
      %p70 = scmp.ne.s32.totalorder %s59, %s60
      %p71 = scmp.eq.s32.totalorder %s25, 0
      %p72 = por %p70, %p71
      %p73 = scmp.ne.s32.totalorder %s59, %s60
      %p74 = scmp.eq.s32.totalorder %s26, 1
      %p75 = por %p73, %p74
      %p77 = scmp.ne.s32.totalorder %s60, %s76
      %p78 = scmp.eq.s32.totalorder %s26, 0
      %p79 = por %p77, %p78
      %s80 = ssub.s32 %s20, %s27
      %p81 = scmp.eq.s32.totalorder %s80, 0
      %s83 = sadd.s32 %s82, 1
      %s84 = scalar_select %p81, %s82, %s83
      %p87 = pneg %p81
      %p88 = scmp.eq.s32.totalorder %s20, 1
      %p89 = por %p87, %p88
      %p90 = scmp.ne.s32.totalorder %s82, %s85
      %p91 = scmp.eq.s32.totalorder %s20, 0
      %p92 = por %p90, %p91
      %p93 = scmp.ne.s32.totalorder %s82, %s85
      %p94 = scmp.eq.s32.totalorder %s25, 1
      %p95 = por %p93, %p94
      %p96 = scmp.ne.s32.totalorder %s85, %s86
      %p97 = scmp.eq.s32.totalorder %s25, 0
      %p98 = por %p96, %p97
      %p99 = scmp.ne.s32.totalorder %s85, %s86
      %p100 = scmp.eq.s32.totalorder %s26, 1
      %p101 = por %p99, %p100
      %p103 = scmp.ne.s32.totalorder %s86, %s102
      %p104 = scmp.eq.s32.totalorder %s26, 0
      %p105 = por %p103, %p104
      %s107 = sadd.s32 %s106, 1
      %p110 = scmp.eq.s32.totalorder %s20, 1
      %p111 = scmp.ne.s32.totalorder %s106, %s108
      %p112 = scmp.eq.s32.totalorder %s20, 0
      %p113 = por %p111, %p112
      %p114 = scmp.ne.s32.totalorder %s106, %s108
      %p115 = scmp.eq.s32.totalorder %s25, 1
      %p116 = por %p114, %p115
      %p117 = scmp.ne.s32.totalorder %s108, %s109
      %p118 = scmp.eq.s32.totalorder %s25, 0
      %p119 = por %p117, %p118
      %p120 = scmp.ne.s32.totalorder %s108, %s109
      %p121 = scmp.eq.s32.totalorder %s26, 1
      %p122 = por %p120, %p121
      %p124 = scmp.ne.s32.totalorder %s109, %s123
      %p125 = scmp.eq.s32.totalorder %s26, 0
      %p126 = por %p124, %p125
      %s128 = sadd.s32 %s127, 1
      %p131 = scmp.eq.s32.totalorder %s20, 1
      %p132 = scmp.ne.s32.totalorder %s127, %s129
      %p133 = scmp.eq.s32.totalorder %s20, 0
      %p134 = por %p132, %p133
      %p135 = scmp.ne.s32.totalorder %s127, %s129
      %p136 = scmp.eq.s32.totalorder %s25, 1
      %p137 = por %p135, %p136
      %p138 = scmp.ne.s32.totalorder %s129, %s130
      %p139 = scmp.eq.s32.totalorder %s25, 0
      %p140 = por %p138, %p139
      %p141 = scmp.ne.s32.totalorder %s129, %s130
      %p142 = scmp.eq.s32.totalorder %s26, 1
      %p143 = por %p141, %p142
      %p145 = scmp.ne.s32.totalorder %s130, %s144
      %p146 = scmp.eq.s32.totalorder %s26, 0
      %p147 = por %p145, %p146
      %s148 = ssub.s32 %s20, %s27
      %p149 = scmp.eq.s32.totalorder %s148, 0
      %s151 = sadd.s32 %s150, 1
      %s152 = scalar_select %p149, %s150, %s151
      %p155 = pneg %p149
      %p156 = scmp.eq.s32.totalorder %s20, 1
      %p157 = por %p155, %p156
      %p158 = scmp.ne.s32.totalorder %s150, %s153
      %p159 = scmp.eq.s32.totalorder %s20, 0
      %p160 = por %p158, %p159
      %p161 = scmp.ne.s32.totalorder %s150, %s153
      %p162 = scmp.eq.s32.totalorder %s25, 1
      %p163 = por %p161, %p162
      %p164 = scmp.ne.s32.totalorder %s153, %s154
      %p165 = scmp.eq.s32.totalorder %s25, 0
      %p166 = por %p164, %p165
      %p167 = scmp.ne.s32.totalorder %s153, %s154
      %p168 = scmp.eq.s32.totalorder %s26, 1
      %p169 = por %p167, %p168
      %p171 = scmp.ne.s32.totalorder %s154, %s170
      %p172 = scmp.eq.s32.totalorder %s26, 0
      %p173 = por %p171, %p172
      %p174 = scmp.le.s32.totalorder 1, %s20
      %p175 = scmp.lt.s32.totalorder %s20, 3
      %p176 = pnand %p174, %p175
      %p177 = pneg %p176
      // Predicated region
      $region9: #{tpu_custom_call.1} parent=5 // pred_check
        _
      $region10: #{tpu_custom_call.1} parent=5 // pred_check_branch
        %179 = sbr.rel (%p176) target = $region12
      $region11: #{tpu_custom_call.1} parent=5 // pred_region
        %s180 = ssub.s32 %s20, 1
        // Predicated region
        $region13: #{tpu_custom_call.1} parent=11 // pred_check
          %p181 = pneg %p119
        $region14: #{tpu_custom_call.1} parent=11 // pred_check_branch
          %183 = sbr.rel (%p181) target = $region16
        $region15: #{tpu_custom_call.1} parent=11 // pred_region
          _
        $region16: #{tpu_custom_call.1} parent=11 // pred_fallthru
          _
        // Predicated region
        $region17: #{tpu_custom_call.1} parent=11 // pred_check
          %p184 = pneg %p140
        $region18: #{tpu_custom_call.1} parent=11 // pred_check_branch
          %186 = sbr.rel (%p184) target = $region20
        $region19: #{tpu_custom_call.1} parent=11 // pred_region
          _
        $region20: #{tpu_custom_call.1} parent=11 // pred_fallthru
          _
      $region12: #{tpu_custom_call.1} parent=5 // pred_fallthru
        _
      %p187 = scmp.lt.s32.totalorder %s20, 2
      // Predicated region
      $region21: #{tpu_custom_call.1} parent=5 // pred_check
        %p188 = pneg %p187
      $region22: #{tpu_custom_call.1} parent=5 // pred_check_branch
        %190 = sbr.rel (%p188) target = $region24
      $region23: #{tpu_custom_call.1} parent=5 // pred_region
        // Predicated region
        $region25: #{tpu_custom_call.1} parent=23 // pred_check
          %p191 = pneg %p40
        $region26: #{tpu_custom_call.1} parent=23 // pred_check_branch
          %193 = sbr.rel (%p191) target = $region28
        $region27: #{tpu_custom_call.1} parent=23 // pred_region
          %s194 = sand.u32 %s30, 1
          %s195 = scalar_lea.sflag [#allocation3], %s194
          %s196 = sand.u32 %s30, 1
          %s197 = smul.addr %s196, 64
          %s198 = scalar_lea.vmem [#allocation2], %s197
          %s199 = smul.u32 4, %s20
          %201 = vsyncadd %s195, 0
          %s202 = smul.addr %s199, 2
          %s203 = smul.addr %s202, 8
          %s204 = scalar_lea.hbm %s0, %s203
          %s205 = sshll.u32 %s204, 4
          %s206 = int_to_ptr.hbm [resolvable:$true] %s205
          %s207 = sshll.u32 %s198, 4
          %s208 = int_to_ptr.vmem [resolvable:$true] %s207
          %213 = dma.hbm_to_vmem [thread:$0]  %s206, 1024, %s208, %s195, 128, 128, 8
        $region28: #{tpu_custom_call.1} parent=23 // pred_fallthru
          _
        // Predicated region
        $region29: #{tpu_custom_call.1} parent=23 // pred_check
          %p214 = pneg %p66
        $region30: #{tpu_custom_call.1} parent=23 // pred_check_branch
          %216 = sbr.rel (%p214) target = $region32
        $region31: #{tpu_custom_call.1} parent=23 // pred_region
          %s217 = smul.u32 4, %s20
          %p218 = scmp.lt.s32.totalorder %s217, 7
          %s219 = scalar_select %p218, %s217, 7
          %s220 = smul.addr %s219, 8
          %s221 = scalar_lea.vmem %s1, %s220
          %s222 = smul.u32 4, %s20
        $region32: #{tpu_custom_call.1} parent=23 // pred_fallthru
          _
        // Predicated region
        $region33: #{tpu_custom_call.1} parent=23 // pred_check
          %p223 = pneg %p92
        $region34: #{tpu_custom_call.1} parent=23 // pred_check_branch
          %225 = sbr.rel (%p223) target = $region36
        $region35: #{tpu_custom_call.1} parent=23 // pred_region
          %s226 = sand.u32 %s82, 1
          %s227 = scalar_lea.sflag [#allocation6], %s226
          %s228 = sand.u32 %s82, 1
          %s229 = smul.addr %s228, 32
          %s230 = scalar_lea.vmem [#allocation5], %s229
          %s231 = smul.u32 4, %s20
          %233 = vsyncadd %s227, 0
          %s234 = smul.addr %s231, 8
          %s235 = scalar_lea.hbm %s2, %s234
          %s236 = sshll.u32 %s235, 4
          %s237 = int_to_ptr.hbm [resolvable:$true] %s236
          %s238 = sshll.u32 %s230, 4
          %s239 = int_to_ptr.vmem [resolvable:$true] %s238
          %244 = dma.hbm_to_vmem [thread:$0]  %s237, 512, %s239, %s227, 128, 128, 8
        $region36: #{tpu_custom_call.1} parent=23 // pred_fallthru
          _
      $region24: #{tpu_custom_call.1} parent=5 // pred_fallthru
        _
      %p245 = scmp.le.s32.totalorder 1, %s20
      %p246 = scmp.lt.s32.totalorder %s20, 3
      %p247 = pnand %p245, %p246
      %p248 = pneg %p247
      // Predicated region
      $region37: #{tpu_custom_call.1} parent=5 // pred_check
        _
      $region38: #{tpu_custom_call.1} parent=5 // pred_check_branch
        %250 = sbr.rel (%p247) target = $region40
      $region39: #{tpu_custom_call.1} parent=5 // pred_region
        %s251 = ssub.s32 %s20, 1
        %s252 = sand.u32 %s33, 1
        %s253 = scalar_lea.sflag [#allocation3], %s252
        %s254 = sand.u32 %s33, 1
        %s255 = smul.addr %s254, 64
        %s256 = scalar_lea.vmem [#allocation2], %s255
        // Predicated region
        $region41: #{tpu_custom_call.1} parent=39 // pred_check
          %p257 = pneg %p46
        $region42: #{tpu_custom_call.1} parent=39 // pred_check_branch
          %259 = sbr.rel (%p257) target = $region44
        $region43: #{tpu_custom_call.1} parent=39 // pred_region
          %261 = dma.done %s253, 1024
        $region44: #{tpu_custom_call.1} parent=39 // pred_fallthru
          _
        %s262 = sand.u32 %s85, 1
        %s263 = scalar_lea.sflag [#allocation6], %s262
        %s264 = sand.u32 %s85, 1
        %s265 = smul.addr %s264, 32
        %s266 = scalar_lea.vmem [#allocation5], %s265
        // Predicated region
        $region45: #{tpu_custom_call.1} parent=39 // pred_check
          %p267 = pneg %p98
        $region46: #{tpu_custom_call.1} parent=39 // pred_check_branch
          %269 = sbr.rel (%p267) target = $region48
        $region47: #{tpu_custom_call.1} parent=39 // pred_region
          %271 = dma.done %s263, 512
        $region48: #{tpu_custom_call.1} parent=39 // pred_fallthru
          _
        %s272 = sand.u32 %s33, 1
        %s273 = scalar_lea.sflag [#allocation3], %s272
        %s274 = sand.u32 %s33, 1
        %s275 = smul.addr %s274, 64
        %s276 = scalar_lea.vmem [#allocation2], %s275
        %p277 = pneg %p46
        %p278 = pneg %p43
        %s279 = smul.u32 4, %s25
        %p280 = scmp.lt.s32.totalorder %s279, 7
        %s281 = scalar_select %p280, %s279, 7
        %s282 = smul.addr %s281, 8
        %s283 = scalar_lea.vmem %s1, %s282
        %p284 = pneg %p72
        %p285 = pneg %p69
        %s286 = sand.u32 %s85, 1
        %s287 = scalar_lea.sflag [#allocation6], %s286
        %s288 = sand.u32 %s85, 1
        %s289 = smul.addr %s288, 32
        %s290 = scalar_lea.vmem [#allocation5], %s289
        %p291 = pneg %p98
        %p292 = pneg %p95
        %p293 = pneg %p119
        %p294 = pneg %p116
        %p295 = pneg %p140
        %p296 = pneg %p137
        %p297 = pneg %p166
        %p298 = pneg %p163
        %s299 = sand.u32 %s153, 1
        %s300 = scalar_lea.sflag [#allocation4], %s299
        %s301 = sand.u32 %s153, 1
        %s302 = smul.addr %s301, 8
        %s303 = scalar_lea.vmem [#allocation7], %s302
        %s304 = smul.u32 4, %s25
        %s305 = smul.u32 4, %s25
        %p306 = scmp.lt.s32.totalorder %s305, 7
        %s307 = scalar_select %p306, %s305, 7
        %s308 = smul.addr %s307, 8
        %s309 = scalar_lea.vmem %s1, %s308
        %s310 = smul.u32 4, %s25
        %s311 = smul.u32 4, %s25
        %v313 = vld [vmem:[%s256] sm:$0xff]
        %v314 = vld [vmem:[%s256 + $0x8] sm:$0xff]
        %v315 = vld [vmem:[%s256 + $0x10] sm:$0xff]
        %v316 = vld [vmem:[%s256 + $0x18] sm:$0xff]
        %v317 = vld [vmem:[%s256 + $0x20] sm:$0xff]
        %v318 = vld [vmem:[%s256 + $0x28] sm:$0xff]
        %v319 = vld [vmem:[%s256 + $0x30] sm:$0xff]
        %v320 = vld [vmem:[%s256 + $0x38] sm:$0xff]
        %v321 = vld [vmem:[%s309] sm:$0xff]
        %v322 = vld [vmem:[%s309 + $0x8] sm:$0xff]
        %v323 = vld [vmem:[%s309 + $0x10] sm:$0xff]
        %v324 = vld [vmem:[%s309 + $0x18] sm:$0xff]
        %v325 = vld [vmem:[%s266] sm:$0xff]
        %v326 = vld [vmem:[%s266 + $0x8] sm:$0xff]
        %v327 = vld [vmem:[%s266 + $0x10] sm:$0xff]
        %v328 = vld [vmem:[%s266 + $0x18] sm:$0xff]
        %v329 = vld [vmem:[%s3] sm:$0xff]
        %v330 = vld [vmem:[%s3 + $0x8] sm:$0xff]
        %v331 = vld [vmem:[%s3 + $0x10] sm:$0xff]
        %v332 = vld [vmem:[%s3 + $0x18] sm:$0xff]
        %v333 = vld [vmem:[%s3 + $0x20] sm:$0xff]
        %v334 = vld [vmem:[%s3 + $0x28] sm:$0xff]
        %v335 = vld [vmem:[%s3 + $0x30] sm:$0xff]
        %v336 = vld [vmem:[%s3 + $0x38] sm:$0xff]
        %v337 = vld [vmem:[%s3 + $0x40] sm:$0xff]
        %v338 = vld [vmem:[%s3 + $0x48] sm:$0xff]
        %v339 = vld [vmem:[%s4] sm:$0x7]
        %v340 = vpack.c.bf16 %v314, %v313
        %v341 = vpack.c.bf16 %v316, %v315
        %v342 = vpack.c.bf16 %v318, %v317
        %v343 = vpack.c.bf16 %v320, %v319
        %v344 = vpack.c.bf16 %v330, %v329
        %v345 = vperm.slane %v339, 0
        %vm346 = vcmask 261120
        %v348 = vsel %vm346, %v340, 0
        %v351 = vsel %vm346, %v341, 0
        %v354 = vsel %vm346, %v342, 0
        %v357 = vsel %vm346, %v343, 0
        %v360 = vsel %vm346, %v344, 0
        %362 = vmatpush.bf16.xpose.msra.mxu0 0
        %363 = vmatpush.bf16.xpose.msra.mxu0 0
        %364 = vmatpush.bf16.xpose.msra.mxu0 0
        %365 = vmatpush.bf16.xpose.msra.mxu0 0
        %366 = vmatpush.bf16.xpose.msra.mxu0 0
        %367 = vmatpush.bf16.xpose.msra.mxu0 0
        %368 = vmatpush.bf16.xpose.msra.mxu0 0
        %369 = vmatpush.bf16.xpose.msra.mxu0 %v360
        %370 = vmatmul.bf16.gmra.mxu0 %v348
        %v371 = vpop.f32.mrf.mxu0
        %v372 = vadd.f32 %v345, %v371
        %v373 = vpop.f32.mrf.mxu0
        %v374 = vadd.f32 %v345, %v373
        %375 = vmatmul.bf16.gmra.mxu0 %v351
        %v376 = vpop.f32.mrf.mxu0
        %v377 = vadd.f32 %v345, %v376
        %v378 = vpop.f32.mrf.mxu0
        %v379 = vadd.f32 %v345, %v378
        %380 = vmatmul.bf16.gmra.mxu0 %v354
        %v381 = vpop.f32.mrf.mxu0
        %v382 = vadd.f32 %v345, %v381
        %v383 = vpop.f32.mrf.mxu0
        %v384 = vadd.f32 %v345, %v383
        %385 = vmatmul.bf16.gmra.mxu0 %v357
        %v386 = vpop.f32.mrf.mxu0
        %v387 = vadd.f32 %v345, %v386
        %v388 = vpop.f32.mrf.mxu0
        %v389 = vadd.f32 %v345, %v388
        %390 = vdwg.mxu0
        %v391 = vpack.c.bf16 %v322, %v321
        %v392 = vpack.c.bf16 %v324, %v323
        %v393 = vpack.c.bf16 %v332, %v331
        %v394 = vpack.c.bf16 %v334, %v333
        %v395 = vperm.slane %v339, 1
        %v397 = vsel %vm346, %v391, 0
        %v400 = vsel %vm346, %v392, 0
        %v403 = vsel %vm346, %v393, 0
        %v406 = vsel %vm346, %v394, 0
        %408 = vmatpush.bf16.xpose.msra.mxu0 0
        %409 = vmatpush.bf16.xpose.msra.mxu0 0
        %410 = vmatpush.bf16.xpose.msra.mxu0 0
        %411 = vmatpush.bf16.xpose.msra.mxu0 0
        %412 = vmatpush.bf16.xpose.msra.mxu0 0
        %413 = vmatpush.bf16.xpose.msra.mxu0 0
        %414 = vmatpush.bf16.xpose.msra.mxu0 %v406
        %415 = vmatpush.bf16.xpose.msra.mxu0 %v403
        %416 = vmatmul.bf16.gmra.mxu0 %v397
        %v417 = vpop.f32.mrf.mxu0
        %v418 = vadd.f32 %v395, %v417
        %v419 = vpop.f32.mrf.mxu0
        %v420 = vadd.f32 %v395, %v419
        %421 = vmatmul.bf16.gmra.mxu0 %v400
        %v422 = vpop.f32.mrf.mxu0
        %v423 = vadd.f32 %v395, %v422
        %v424 = vpop.f32.mrf.mxu0
        %v425 = vadd.f32 %v395, %v424
        %426 = vdwg.mxu0
        %v427 = vpack.c.bf16 %v326, %v325
        %v428 = vpack.c.bf16 %v328, %v327
        %v429 = vpack.c.bf16 %v336, %v335
        %v430 = vpack.c.bf16 %v338, %v337
        %v431 = vperm.slane %v339, 2
        %v433 = vsel %vm346, %v427, 0
        %v436 = vsel %vm346, %v428, 0
        %v439 = vsel %vm346, %v429, 0
        %v442 = vsel %vm346, %v430, 0
        %444 = vmatpush.bf16.xpose.msra.mxu0 0
        %445 = vmatpush.bf16.xpose.msra.mxu0 0
        %446 = vmatpush.bf16.xpose.msra.mxu0 0
        %447 = vmatpush.bf16.xpose.msra.mxu0 0
        %448 = vmatpush.bf16.xpose.msra.mxu0 0
        %449 = vmatpush.bf16.xpose.msra.mxu0 0
        %450 = vmatpush.bf16.xpose.msra.mxu0 %v442
        %451 = vmatpush.bf16.xpose.msra.mxu0 %v439
        %452 = vmatmul.bf16.gmra.mxu0 %v433
        %v453 = vpop.f32.mrf.mxu0
        %v454 = vadd.f32 %v431, %v453
        %v455 = vpop.f32.mrf.mxu0
        %v456 = vadd.f32 %v431, %v455
        %457 = vmatmul.bf16.gmra.mxu0 %v436
        %v458 = vpop.f32.mrf.mxu0
        %v459 = vadd.f32 %v431, %v458
        %v460 = vpop.f32.mrf.mxu0
        %v461 = vadd.f32 %v431, %v460
        %462 = vdwg.mxu0
        %v463 = vlaneseq
        %v464 = vshrl.u32 %v463, 7
        %v465 = vadd.s32 %v464, 8
        %v466 = vlaneseq
        %v467 = vand.u32 %v466, 127
        %vm468 = vcmp.eq.s32.totalorder %v464, %v467
        %vm469 = vcmp.eq.s32.totalorder %v465, %v467
        %v470 = vsel %vm468, 1, 0
        %v471 = vsel %vm469, 1, 0
        %v472 = vcvt.s32.f32 %v470
        %v473 = vcvt.s32.f32 %v471
        %v474 = vpack.c.bf16 %v472, %v472
        %v475 = vpack.c.bf16 %v473, %v473
        %v476 = vpack.c.bf16 %v372, %v372
        %v477 = vpack.c.bf16 %v374, %v374
        %v478 = vpack.c.bf16 %v377, %v377
        %v479 = vpack.c.bf16 %v379, %v379
        %v480 = vpack.c.bf16 %v382, %v382
        %v481 = vpack.c.bf16 %v384, %v384
        %v482 = vpack.c.bf16 %v387, %v387
        %v483 = vpack.c.bf16 %v389, %v389
        %v486 = vunpack.c.l.b16 %v474
        %v487 = vunpack.c.l.b16 %v475
        %v488 = vpack.c.b16 %v487, %v486
        %vm489 = vcmask 130048
        %v491 = vsel %vm489, %v488, 0
        %v494 = vsel %vm489, %v476, 0
        %496 = vmatpush.bf16.xpose.msra.mxu0 0
        %497 = vmatpush.bf16.xpose.msra.mxu0 0
        %498 = vmatpush.bf16.xpose.msra.mxu0 0
        %499 = vmatpush.bf16.xpose.msra.mxu0 0
        %500 = vmatpush.bf16.xpose.msra.mxu0 0
        %501 = vmatpush.bf16.xpose.msra.mxu0 0
        %502 = vmatpush.bf16.xpose.msra.mxu0 0
        %503 = vmatpush.bf16.xpose.msra.mxu0 %v494
        %504 = vmatmul.bf16.gmra.mxu0 %v491
        %v505 = vpop.f32.mrf.mxu0
        %v506 = vadd.f32 0.0, %v505
        %v507 = vpop.f32.mrf.mxu0
        %v508 = vadd.f32 0.0, %v507
        %509 = vdwg.mxu0
        %v511 = vsel %vm489, %v477, 0
        %513 = vmatpush.bf16.xpose.msra.mxu0 0
        %514 = vmatpush.bf16.xpose.msra.mxu0 0
        %515 = vmatpush.bf16.xpose.msra.mxu0 0
        %516 = vmatpush.bf16.xpose.msra.mxu0 0
        %517 = vmatpush.bf16.xpose.msra.mxu0 0
        %518 = vmatpush.bf16.xpose.msra.mxu0 0
        %519 = vmatpush.bf16.xpose.msra.mxu0 0
        %520 = vmatpush.bf16.xpose.msra.mxu0 %v511
        %521 = vmatmul.bf16.gmra.mxu0 %v491
        %v522 = vpop.f32.mrf.mxu0
        %v523 = vadd.f32 0.0, %v522
        %v524 = vpop.f32.mrf.mxu0
        %v525 = vadd.f32 0.0, %v524
        %526 = vdwg.mxu0
        %v528 = vsel %vm489, %v478, 0
        %530 = vmatpush.bf16.xpose.msra.mxu0 0
        %531 = vmatpush.bf16.xpose.msra.mxu0 0
        %532 = vmatpush.bf16.xpose.msra.mxu0 0
        %533 = vmatpush.bf16.xpose.msra.mxu0 0
        %534 = vmatpush.bf16.xpose.msra.mxu0 0
        %535 = vmatpush.bf16.xpose.msra.mxu0 0
        %536 = vmatpush.bf16.xpose.msra.mxu0 0
        %537 = vmatpush.bf16.xpose.msra.mxu0 %v528
        %538 = vmatmul.bf16.gmra.mxu0 %v491
        %v539 = vpop.f32.mrf.mxu0
        %v540 = vadd.f32 0.0, %v539
        %v541 = vpop.f32.mrf.mxu0
        %v542 = vadd.f32 0.0, %v541
        %543 = vdwg.mxu0
        %v545 = vsel %vm489, %v479, 0
        %547 = vmatpush.bf16.xpose.msra.mxu0 0
        %548 = vmatpush.bf16.xpose.msra.mxu0 0
        %549 = vmatpush.bf16.xpose.msra.mxu0 0
        %550 = vmatpush.bf16.xpose.msra.mxu0 0
        %551 = vmatpush.bf16.xpose.msra.mxu0 0
        %552 = vmatpush.bf16.xpose.msra.mxu0 0
        %553 = vmatpush.bf16.xpose.msra.mxu0 0
        %554 = vmatpush.bf16.xpose.msra.mxu0 %v545
        %555 = vmatmul.bf16.gmra.mxu0 %v491
        %v556 = vpop.f32.mrf.mxu0
        %v557 = vadd.f32 0.0, %v556
        %v558 = vpop.f32.mrf.mxu0
        %v559 = vadd.f32 0.0, %v558
        %560 = vdwg.mxu0
        %v562 = vsel %vm489, %v480, 0
        %564 = vmatpush.bf16.xpose.msra.mxu0 0
        %565 = vmatpush.bf16.xpose.msra.mxu0 0
        %566 = vmatpush.bf16.xpose.msra.mxu0 0
        %567 = vmatpush.bf16.xpose.msra.mxu0 0
        %568 = vmatpush.bf16.xpose.msra.mxu0 0
        %569 = vmatpush.bf16.xpose.msra.mxu0 0
        %570 = vmatpush.bf16.xpose.msra.mxu0 0
        %571 = vmatpush.bf16.xpose.msra.mxu0 %v562
        %572 = vmatmul.bf16.gmra.mxu0 %v491
        %v573 = vpop.f32.mrf.mxu0
        %v574 = vadd.f32 0.0, %v573
        %v575 = vpop.f32.mrf.mxu0
        %v576 = vadd.f32 0.0, %v575
        %577 = vdwg.mxu0
        %v579 = vsel %vm489, %v481, 0
        %581 = vmatpush.bf16.xpose.msra.mxu0 0
        %582 = vmatpush.bf16.xpose.msra.mxu0 0
        %583 = vmatpush.bf16.xpose.msra.mxu0 0
        %584 = vmatpush.bf16.xpose.msra.mxu0 0
        %585 = vmatpush.bf16.xpose.msra.mxu0 0
        %586 = vmatpush.bf16.xpose.msra.mxu0 0
        %587 = vmatpush.bf16.xpose.msra.mxu0 0
        %588 = vmatpush.bf16.xpose.msra.mxu0 %v579
        %589 = vmatmul.bf16.gmra.mxu0 %v491
        %v590 = vpop.f32.mrf.mxu0
        %v591 = vadd.f32 0.0, %v590
        %v592 = vpop.f32.mrf.mxu0
        %v593 = vadd.f32 0.0, %v592
        %594 = vdwg.mxu0
        %v596 = vsel %vm489, %v482, 0
        %598 = vmatpush.bf16.xpose.msra.mxu0 0
        %599 = vmatpush.bf16.xpose.msra.mxu0 0
        %600 = vmatpush.bf16.xpose.msra.mxu0 0
        %601 = vmatpush.bf16.xpose.msra.mxu0 0
        %602 = vmatpush.bf16.xpose.msra.mxu0 0
        %603 = vmatpush.bf16.xpose.msra.mxu0 0
        %604 = vmatpush.bf16.xpose.msra.mxu0 0
        %605 = vmatpush.bf16.xpose.msra.mxu0 %v596
        %606 = vmatmul.bf16.gmra.mxu0 %v491
        %v607 = vpop.f32.mrf.mxu0
        %v608 = vadd.f32 0.0, %v607
        %v609 = vpop.f32.mrf.mxu0
        %v610 = vadd.f32 0.0, %v609
        %611 = vdwg.mxu0
        %v613 = vsel %vm489, %v483, 0
        %615 = vmatpush.bf16.xpose.msra.mxu0 0
        %616 = vmatpush.bf16.xpose.msra.mxu0 0
        %617 = vmatpush.bf16.xpose.msra.mxu0 0
        %618 = vmatpush.bf16.xpose.msra.mxu0 0
        %619 = vmatpush.bf16.xpose.msra.mxu0 0
        %620 = vmatpush.bf16.xpose.msra.mxu0 0
        %621 = vmatpush.bf16.xpose.msra.mxu0 0
        %622 = vmatpush.bf16.xpose.msra.mxu0 %v613
        %623 = vmatmul.bf16.gmra.mxu0 %v491
        %v624 = vpop.f32.mrf.mxu0
        %v625 = vadd.f32 0.0, %v624
        %v626 = vpop.f32.mrf.mxu0
        %v627 = vadd.f32 0.0, %v626
        %628 = vdwg.mxu0
        %v629 = vpack.c.bf16 %v506, %v506
        %v630 = vpack.c.bf16 %v508, %v508
        %v631 = vpack.c.bf16 %v523, %v523
        %v632 = vpack.c.bf16 %v525, %v525
        %v633 = vpack.c.bf16 %v540, %v540
        %v634 = vpack.c.bf16 %v542, %v542
        %v635 = vpack.c.bf16 %v557, %v557
        %v636 = vpack.c.bf16 %v559, %v559
        %v637 = vpack.c.bf16 %v574, %v574
        %v638 = vpack.c.bf16 %v576, %v576
        %v639 = vpack.c.bf16 %v591, %v591
        %v640 = vpack.c.bf16 %v593, %v593
        %v641 = vpack.c.bf16 %v608, %v608
        %v642 = vpack.c.bf16 %v610, %v610
        %v643 = vpack.c.bf16 %v625, %v625
        %v644 = vpack.c.bf16 %v627, %v627
        %v645 = vpack.c.bf16 %v418, %v418
        %v646 = vpack.c.bf16 %v420, %v420
        %v647 = vpack.c.bf16 %v423, %v423
        %v648 = vpack.c.bf16 %v425, %v425
        %v653 = vunpack.c.l.b16 %v629
        %v654 = vunpack.c.l.b16 %v630
        %v655 = vunpack.c.l.b16 %v631
        %v656 = vunpack.c.l.b16 %v632
        %v657 = vpack.c.b16 %v654, %v653
        %v658 = vpack.c.b16 %v656, %v655
        %vm659 = vcmask 64512
        %v661 = vsel %vm659, %v657, 0
        %v664 = vsel %vm659, %v658, 0
        %vm666 = vcmask 1043456
        %v668 = vsel %vm666, %v645, 0
        %670 = vmatpush.bf16.msra.mxu0 0
        %671 = vmatpush.bf16.msra.mxu0 0
        %672 = vmatpush.bf16.msra.mxu0 0
        %673 = vmatpush.bf16.msra.mxu0 0
        %674 = vmatpush.bf16.msra.mxu0 0
        %675 = vmatpush.bf16.msra.mxu0 0
        %676 = vmatpush.bf16.msra.mxu0 0
        %677 = vmatpush.bf16.msra.mxu0 %v668
        %678 = vmatmul.bf16.gmra.mxu0 %v661
        %v679 = vpop.f32.mrf.mxu0
        %v680 = vadd.f32 0.0, %v679
        %v681 = vpop.f32.mrf.mxu0
        %v682 = vadd.f32 0.0, %v681
        %683 = vmatmul.bf16.gmra.mxu0 %v664
        %v684 = vpop.f32.mrf.mxu0
        %v685 = vadd.f32 0.0, %v684
        %v686 = vpop.f32.mrf.mxu0
        %v687 = vadd.f32 0.0, %v686
        %688 = vdwg.mxu0
        %v693 = vunpack.c.l.b16 %v633
        %v694 = vunpack.c.l.b16 %v634
        %v695 = vunpack.c.l.b16 %v635
        %v696 = vunpack.c.l.b16 %v636
        %v697 = vpack.c.b16 %v694, %v693
        %v698 = vpack.c.b16 %v696, %v695
        %v700 = vsel %vm659, %v697, 0
        %v703 = vsel %vm659, %v698, 0
        %v706 = vsel %vm666, %v646, 0
        %708 = vmatpush.bf16.msra.mxu0 0
        %709 = vmatpush.bf16.msra.mxu0 0
        %710 = vmatpush.bf16.msra.mxu0 0
        %711 = vmatpush.bf16.msra.mxu0 0
        %712 = vmatpush.bf16.msra.mxu0 0
        %713 = vmatpush.bf16.msra.mxu0 0
        %714 = vmatpush.bf16.msra.mxu0 0
        %715 = vmatpush.bf16.msra.mxu0 %v706
        %716 = vmatmul.bf16.gmra.mxu0 %v700
        %v717 = vpop.f32.mrf.mxu0
        %v718 = vadd.f32 0.0, %v717
        %v719 = vpop.f32.mrf.mxu0
        %v720 = vadd.f32 0.0, %v719
        %721 = vmatmul.bf16.gmra.mxu0 %v703
        %v722 = vpop.f32.mrf.mxu0
        %v723 = vadd.f32 0.0, %v722
        %v724 = vpop.f32.mrf.mxu0
        %v725 = vadd.f32 0.0, %v724
        %726 = vdwg.mxu0
        %v731 = vunpack.c.l.b16 %v637
        %v732 = vunpack.c.l.b16 %v638
        %v733 = vunpack.c.l.b16 %v639
        %v734 = vunpack.c.l.b16 %v640
        %v735 = vpack.c.b16 %v732, %v731
        %v736 = vpack.c.b16 %v734, %v733
        %v738 = vsel %vm659, %v735, 0
        %v741 = vsel %vm659, %v736, 0
        %v744 = vsel %vm666, %v647, 0
        %746 = vmatpush.bf16.msra.mxu0 0
        %747 = vmatpush.bf16.msra.mxu0 0
        %748 = vmatpush.bf16.msra.mxu0 0
        %749 = vmatpush.bf16.msra.mxu0 0
        %750 = vmatpush.bf16.msra.mxu0 0
        %751 = vmatpush.bf16.msra.mxu0 0
        %752 = vmatpush.bf16.msra.mxu0 0
        %753 = vmatpush.bf16.msra.mxu0 %v744
        %754 = vmatmul.bf16.gmra.mxu0 %v738
        %v755 = vpop.f32.mrf.mxu0
        %v756 = vadd.f32 0.0, %v755
        %v757 = vpop.f32.mrf.mxu0
        %v758 = vadd.f32 0.0, %v757
        %759 = vmatmul.bf16.gmra.mxu0 %v741
        %v760 = vpop.f32.mrf.mxu0
        %v761 = vadd.f32 0.0, %v760
        %v762 = vpop.f32.mrf.mxu0
        %v763 = vadd.f32 0.0, %v762
        %764 = vdwg.mxu0
        %v769 = vunpack.c.l.b16 %v641
        %v770 = vunpack.c.l.b16 %v642
        %v771 = vunpack.c.l.b16 %v643
        %v772 = vunpack.c.l.b16 %v644
        %v773 = vpack.c.b16 %v770, %v769
        %v774 = vpack.c.b16 %v772, %v771
        %v776 = vsel %vm659, %v773, 0
        %v779 = vsel %vm659, %v774, 0
        %v782 = vsel %vm666, %v648, 0
        %784 = vmatpush.bf16.msra.mxu0 0
        %785 = vmatpush.bf16.msra.mxu0 0
        %786 = vmatpush.bf16.msra.mxu0 0
        %787 = vmatpush.bf16.msra.mxu0 0
        %788 = vmatpush.bf16.msra.mxu0 0
        %789 = vmatpush.bf16.msra.mxu0 0
        %790 = vmatpush.bf16.msra.mxu0 0
        %791 = vmatpush.bf16.msra.mxu0 %v782
        %792 = vmatmul.bf16.gmra.mxu0 %v776
        %v793 = vpop.f32.mrf.mxu0
        %v794 = vadd.f32 0.0, %v793
        %v795 = vpop.f32.mrf.mxu0
        %v796 = vadd.f32 0.0, %v795
        %797 = vmatmul.bf16.gmra.mxu0 %v779
        %v798 = vpop.f32.mrf.mxu0
        %v799 = vadd.f32 0.0, %v798
        %v800 = vpop.f32.mrf.mxu0
        %v801 = vadd.f32 0.0, %v800
        %802 = vdwg.mxu0
        %v803 = vsel %vm346, %v680, -inf
        %804 = vmax.xlane.f32.xlu0 %v803
        %v805 = vpop.xlane.xlu0 %804
        %v806 = vsel %vm346, %v682, -inf
        %807 = vmax.xlane.f32.xlu0 %v806
        %v808 = vpop.xlane.xlu0 %807
        %v809 = vsel %vm346, %v685, -inf
        %810 = vmax.xlane.f32.xlu0 %v809
        %v811 = vpop.xlane.xlu0 %810
        %v812 = vsel %vm346, %v687, -inf
        %813 = vmax.xlane.f32.xlu0 %v812
        %v814 = vpop.xlane.xlu0 %813
        %v815 = vsel %vm346, %v718, -inf
        %816 = vmax.xlane.f32.xlu0 %v815
        %v817 = vpop.xlane.xlu0 %816
        %v818 = vsel %vm346, %v720, -inf
        %819 = vmax.xlane.f32.xlu0 %v818
        %v820 = vpop.xlane.xlu0 %819
        %v821 = vsel %vm346, %v723, -inf
        %822 = vmax.xlane.f32.xlu0 %v821
        %v823 = vpop.xlane.xlu0 %822
        %v824 = vsel %vm346, %v725, -inf
        %825 = vmax.xlane.f32.xlu0 %v824
        %v826 = vpop.xlane.xlu0 %825
        %v827 = vsel %vm346, %v756, -inf
        %828 = vmax.xlane.f32.xlu0 %v827
        %v829 = vpop.xlane.xlu0 %828
        %v830 = vsel %vm346, %v758, -inf
        %831 = vmax.xlane.f32.xlu0 %v830
        %v832 = vpop.xlane.xlu0 %831
        %v833 = vsel %vm346, %v761, -inf
        %834 = vmax.xlane.f32.xlu0 %v833
        %v835 = vpop.xlane.xlu0 %834
        %v836 = vsel %vm346, %v763, -inf
        %837 = vmax.xlane.f32.xlu0 %v836
        %v838 = vpop.xlane.xlu0 %837
        %v839 = vsel %vm346, %v794, -inf
        %840 = vmax.xlane.f32.xlu0 %v839
        %v841 = vpop.xlane.xlu0 %840
        %v842 = vsel %vm346, %v796, -inf
        %843 = vmax.xlane.f32.xlu0 %v842
        %v844 = vpop.xlane.xlu0 %843
        %v845 = vsel %vm346, %v799, -inf
        %846 = vmax.xlane.f32.xlu0 %v845
        %v847 = vpop.xlane.xlu0 %846
        %v848 = vsel %vm346, %v801, -inf
        %849 = vmax.xlane.f32.xlu0 %v848
        %v850 = vpop.xlane.xlu0 %849
        %v851 = vsub.f32 %v680, %v805
        %v852 = vsub.f32 %v682, %v808
        %v853 = vsub.f32 %v685, %v811
        %v854 = vsub.f32 %v687, %v814
        %v855 = vsub.f32 %v718, %v817
        %v856 = vsub.f32 %v720, %v820
        %v857 = vsub.f32 %v723, %v823
        %v858 = vsub.f32 %v725, %v826
        %v859 = vsub.f32 %v756, %v829
        %v860 = vsub.f32 %v758, %v832
        %v861 = vsub.f32 %v761, %v835
        %v862 = vsub.f32 %v763, %v838
        %v863 = vsub.f32 %v794, %v841
        %v864 = vsub.f32 %v796, %v844
        %v865 = vsub.f32 %v799, %v847
        %v866 = vsub.f32 %v801, %v850
        %v867 = vmul.f32 %v851, 1.442695
        %v868 = vpow.pop %v867
        %v869 = vmul.f32 %v852, 1.442695
        %v870 = vpow.pop %v869
        %v871 = vmul.f32 %v853, 1.442695
        %v872 = vpow.pop %v871
        %v873 = vmul.f32 %v854, 1.442695
        %v874 = vpow.pop %v873
        %v875 = vmul.f32 %v855, 1.442695
        %v876 = vpow.pop %v875
        %v877 = vmul.f32 %v856, 1.442695
        %v878 = vpow.pop %v877
        %v879 = vmul.f32 %v857, 1.442695
        %v880 = vpow.pop %v879
        %v881 = vmul.f32 %v858, 1.442695
        %v882 = vpow.pop %v881
        %v883 = vmul.f32 %v859, 1.442695
        %v884 = vpow.pop %v883
        %v885 = vmul.f32 %v860, 1.442695
        %v886 = vpow.pop %v885
        %v887 = vmul.f32 %v861, 1.442695
        %v888 = vpow.pop %v887
        %v889 = vmul.f32 %v862, 1.442695
        %v890 = vpow.pop %v889
        %v891 = vmul.f32 %v863, 1.442695
        %v892 = vpow.pop %v891
        %v893 = vmul.f32 %v864, 1.442695
        %v894 = vpow.pop %v893
        %v895 = vmul.f32 %v865, 1.442695
        %v896 = vpow.pop %v895
        %v897 = vmul.f32 %v866, 1.442695
        %v898 = vpow.pop %v897
        %v899 = vsel %vm346, %v868, 0.0
        %900 = vadd.xlane.f32.xlu0 %v899
        %v901 = vpop.xlane.xlu0 %900
        %v902 = vsel %vm346, %v870, 0.0
        %903 = vadd.xlane.f32.xlu0 %v902
        %v904 = vpop.xlane.xlu0 %903
        %v905 = vsel %vm346, %v872, 0.0
        %906 = vadd.xlane.f32.xlu0 %v905
        %v907 = vpop.xlane.xlu0 %906
        %v908 = vsel %vm346, %v874, 0.0
        %909 = vadd.xlane.f32.xlu0 %v908
        %v910 = vpop.xlane.xlu0 %909
        %v911 = vsel %vm346, %v876, 0.0
        %912 = vadd.xlane.f32.xlu0 %v911
        %v913 = vpop.xlane.xlu0 %912
        %v914 = vsel %vm346, %v878, 0.0
        %915 = vadd.xlane.f32.xlu0 %v914
        %v916 = vpop.xlane.xlu0 %915
        %v917 = vsel %vm346, %v880, 0.0
        %918 = vadd.xlane.f32.xlu0 %v917
        %v919 = vpop.xlane.xlu0 %918
        %v920 = vsel %vm346, %v882, 0.0
        %921 = vadd.xlane.f32.xlu0 %v920
        %v922 = vpop.xlane.xlu0 %921
        %v923 = vsel %vm346, %v884, 0.0
        %924 = vadd.xlane.f32.xlu0 %v923
        %v925 = vpop.xlane.xlu0 %924
        %v926 = vsel %vm346, %v886, 0.0
        %927 = vadd.xlane.f32.xlu0 %v926
        %v928 = vpop.xlane.xlu0 %927
        %v929 = vsel %vm346, %v888, 0.0
        %930 = vadd.xlane.f32.xlu0 %v929
        %v931 = vpop.xlane.xlu0 %930
        %v932 = vsel %vm346, %v890, 0.0
        %933 = vadd.xlane.f32.xlu0 %v932
        %v934 = vpop.xlane.xlu0 %933
        %v935 = vsel %vm346, %v892, 0.0
        %936 = vadd.xlane.f32.xlu0 %v935
        %v937 = vpop.xlane.xlu0 %936
        %v938 = vsel %vm346, %v894, 0.0
        %939 = vadd.xlane.f32.xlu0 %v938
        %v940 = vpop.xlane.xlu0 %939
        %v941 = vsel %vm346, %v896, 0.0
        %942 = vadd.xlane.f32.xlu0 %v941
        %v943 = vpop.xlane.xlu0 %942
        %v944 = vsel %vm346, %v898, 0.0
        %945 = vadd.xlane.f32.xlu0 %v944
        %v946 = vpop.xlane.xlu0 %945
        %v947 = vrcp.pop %v901
        %v948 = vrcp.pop %v904
        %v949 = vrcp.pop %v907
        %v950 = vrcp.pop %v910
        %v951 = vrcp.pop %v913
        %v952 = vrcp.pop %v916
        %v953 = vrcp.pop %v919
        %v954 = vrcp.pop %v922
        %v955 = vrcp.pop %v925
        %v956 = vrcp.pop %v928
        %v957 = vrcp.pop %v931
        %v958 = vrcp.pop %v934
        %v959 = vrcp.pop %v937
        %v960 = vrcp.pop %v940
        %v961 = vrcp.pop %v943
        %v962 = vrcp.pop %v946
        %v963 = vmul.f32 %v868, %v947
        %v964 = vmul.f32 %v870, %v948
        %v965 = vmul.f32 %v872, %v949
        %v966 = vmul.f32 %v874, %v950
        %v967 = vmul.f32 %v876, %v951
        %v968 = vmul.f32 %v878, %v952
        %v969 = vmul.f32 %v880, %v953
        %v970 = vmul.f32 %v882, %v954
        %v971 = vmul.f32 %v884, %v955
        %v972 = vmul.f32 %v886, %v956
        %v973 = vmul.f32 %v888, %v957
        %v974 = vmul.f32 %v890, %v958
        %v975 = vmul.f32 %v892, %v959
        %v976 = vmul.f32 %v894, %v960
        %v977 = vmul.f32 %v896, %v961
        %v978 = vmul.f32 %v898, %v962
        %v979 = vpack.c.bf16 %v454, %v454
        %v980 = vpack.c.bf16 %v456, %v456
        %v981 = vpack.c.bf16 %v459, %v459
        %v982 = vpack.c.bf16 %v461, %v461
        %v983 = vpack.c.bf16 %v963, %v963
        %v984 = vpack.c.bf16 %v964, %v964
        %v985 = vpack.c.bf16 %v965, %v965
        %v986 = vpack.c.bf16 %v966, %v966
        %v987 = vpack.c.bf16 %v967, %v967
        %v988 = vpack.c.bf16 %v968, %v968
        %v989 = vpack.c.bf16 %v969, %v969
        %v990 = vpack.c.bf16 %v970, %v970
        %v991 = vpack.c.bf16 %v971, %v971
        %v992 = vpack.c.bf16 %v972, %v972
        %v993 = vpack.c.bf16 %v973, %v973
        %v994 = vpack.c.bf16 %v974, %v974
        %v995 = vpack.c.bf16 %v975, %v975
        %v996 = vpack.c.bf16 %v976, %v976
        %v997 = vpack.c.bf16 %v977, %v977
        %v998 = vpack.c.bf16 %v978, %v978
        %v1003 = vunpack.c.l.b16 %v983
        %v1004 = vunpack.c.l.b16 %v984
        %v1005 = vunpack.c.l.b16 %v985
        %v1006 = vunpack.c.l.b16 %v986
        %v1007 = vpack.c.b16 %v1004, %v1003
        %v1008 = vpack.c.b16 %v1006, %v1005
        %v1012 = vsel %vm346, %v979, 0
        %1014 = vmatpush.bf16.msra.mxu0 0
        %1015 = vmatpush.bf16.msra.mxu0 0
        %1016 = vmatpush.bf16.msra.mxu0 0
        %1017 = vmatpush.bf16.msra.mxu0 0
        %1018 = vmatpush.bf16.msra.mxu0 0
        %1019 = vmatpush.bf16.msra.mxu0 0
        %1020 = vmatpush.bf16.msra.mxu0 %v1008
        %1021 = vmatpush.bf16.msra.mxu0 %v1007
        %1022 = vmatmul.bf16.gmra.mxu0 %v1012
        %v1023 = vpop.f32.mrf.mxu0
        %v1024 = vadd.f32 0.0, %v1023
        %v1025 = vpop.f32.mrf.mxu0
        %1026 = vdwg.mxu0
        %v1031 = vunpack.c.l.b16 %v987
        %v1032 = vunpack.c.l.b16 %v988
        %v1033 = vunpack.c.l.b16 %v989
        %v1034 = vunpack.c.l.b16 %v990
        %v1035 = vpack.c.b16 %v1032, %v1031
        %v1036 = vpack.c.b16 %v1034, %v1033
        %v1040 = vsel %vm346, %v980, 0
        %1042 = vmatpush.bf16.msra.mxu0 0
        %1043 = vmatpush.bf16.msra.mxu0 0
        %1044 = vmatpush.bf16.msra.mxu0 0
        %1045 = vmatpush.bf16.msra.mxu0 0
        %1046 = vmatpush.bf16.msra.mxu0 0
        %1047 = vmatpush.bf16.msra.mxu0 0
        %1048 = vmatpush.bf16.msra.mxu0 %v1036
        %1049 = vmatpush.bf16.msra.mxu0 %v1035
        %1050 = vmatmul.bf16.gmra.mxu0 %v1040
        %v1051 = vpop.f32.mrf.mxu0
        %v1052 = vadd.f32 0.0, %v1051
        %v1053 = vpop.f32.mrf.mxu0
        %1054 = vdwg.mxu0
        %v1059 = vunpack.c.l.b16 %v991
        %v1060 = vunpack.c.l.b16 %v992
        %v1061 = vunpack.c.l.b16 %v993
        %v1062 = vunpack.c.l.b16 %v994
        %v1063 = vpack.c.b16 %v1060, %v1059
        %v1064 = vpack.c.b16 %v1062, %v1061
        %v1068 = vsel %vm346, %v981, 0
        %1070 = vmatpush.bf16.msra.mxu0 0
        %1071 = vmatpush.bf16.msra.mxu0 0
        %1072 = vmatpush.bf16.msra.mxu0 0
        %1073 = vmatpush.bf16.msra.mxu0 0
        %1074 = vmatpush.bf16.msra.mxu0 0
        %1075 = vmatpush.bf16.msra.mxu0 0
        %1076 = vmatpush.bf16.msra.mxu0 %v1064
        %1077 = vmatpush.bf16.msra.mxu0 %v1063
        %1078 = vmatmul.bf16.gmra.mxu0 %v1068
        %v1079 = vpop.f32.mrf.mxu0
        %v1080 = vadd.f32 0.0, %v1079
        %v1081 = vpop.f32.mrf.mxu0
        %1082 = vdwg.mxu0
        %v1087 = vunpack.c.l.b16 %v995
        %v1088 = vunpack.c.l.b16 %v996
        %v1089 = vunpack.c.l.b16 %v997
        %v1090 = vunpack.c.l.b16 %v998
        %v1091 = vpack.c.b16 %v1088, %v1087
        %v1092 = vpack.c.b16 %v1090, %v1089
        %v1096 = vsel %vm346, %v982, 0
        %1098 = vmatpush.bf16.msra.mxu0 0
        %1099 = vmatpush.bf16.msra.mxu0 0
        %1100 = vmatpush.bf16.msra.mxu0 0
        %1101 = vmatpush.bf16.msra.mxu0 0
        %1102 = vmatpush.bf16.msra.mxu0 0
        %1103 = vmatpush.bf16.msra.mxu0 0
        %1104 = vmatpush.bf16.msra.mxu0 %v1092
        %1105 = vmatpush.bf16.msra.mxu0 %v1091
        %1106 = vmatmul.bf16.gmra.mxu0 %v1096
        %v1107 = vpop.f32.mrf.mxu0
        %v1108 = vadd.f32 0.0, %v1107
        %v1109 = vpop.f32.mrf.mxu0
        %1110 = vdwg.mxu0
        %1112 = vrot.lane.b32.xlu0 %v1052, 32
        %v1113 = vpop.permute.xlu0 %1112
        %1116 = vrot.lane.b32.xlu0 %v1080, 64
        %v1117 = vpop.permute.xlu0 %1116
        %1120 = vrot.lane.b32.xlu0 %v1108, 96
        %v1121 = vpop.permute.xlu0 %1120
        %v1123 = vsel %vm346, %v1024, %v1113
        %vm1124 = vcmask 523264
        %v1125 = vsel %vm1124, %v1123, %v1117
        %vm1126 = vcmask 785408
        %v1127 = vsel %vm1126, %v1125, %v1121
        %1128 = vst [vmem:[%s303] sm:$0xff] %v1127
        %s1129 = sand.u32 %s153, 1
        %s1130 = scalar_lea.sflag [#allocation4], %s1129
        %s1131 = sand.u32 %s153, 1
        %s1132 = smul.addr %s1131, 8
        %s1133 = scalar_lea.vmem [#allocation7], %s1132
        // Predicated region
        $region49: #{tpu_custom_call.1} parent=39 // pred_check
          %p1134 = pneg %p163
        $region50: #{tpu_custom_call.1} parent=39 // pred_check_branch
          %1136 = sbr.rel (%p1134) target = $region52
        $region51: #{tpu_custom_call.1} parent=39 // pred_region
          %1138 = vsyncadd %s1130, 0
          %s1139 = smul.addr %s25, 8
          %s1140 = scalar_lea.hbm %s5, %s1139
          %s1142 = sshll.u32 %s1133, 4
          %s1143 = int_to_ptr.vmem [resolvable:$true] %s1142
          %s1144 = sshll.u32 %s1140, 4
          %s1145 = int_to_ptr.hbm [resolvable:$true] %s1144
          %1147 = dma.vmem_to_hbm [thread:$0]  %s1143, 128, %s1145, %s1130
        $region52: #{tpu_custom_call.1} parent=39 // pred_fallthru
          _
      $region40: #{tpu_custom_call.1} parent=5 // pred_fallthru
        _
      %p1148 = scmp.le.s32.totalorder 2, %s20
      // Predicated region
      $region53: #{tpu_custom_call.1} parent=5 // pred_check
        %p1149 = pneg %p1148
      $region54: #{tpu_custom_call.1} parent=5 // pred_check_branch
        %1151 = sbr.rel (%p1149) target = $region56
      $region55: #{tpu_custom_call.1} parent=5 // pred_region
        %s1152 = ssub.s32 %s20, 2
        // Predicated region
        $region57: #{tpu_custom_call.1} parent=55 // pred_check
          %p1153 = pneg %p169
        $region58: #{tpu_custom_call.1} parent=55 // pred_check_branch
          %1155 = sbr.rel (%p1153) target = $region60
        $region59: #{tpu_custom_call.1} parent=55 // pred_region
          %s1156 = sand.u32 %s154, 1
          %s1157 = scalar_lea.sflag [#allocation4], %s1156
          %s1158 = sand.u32 %s154, 1
          %s1159 = smul.addr %s1158, 8
          %s1160 = scalar_lea.vmem [#allocation7], %s1159
          %1162 = dma.done %s1157, 128
        $region60: #{tpu_custom_call.1} parent=55 // pred_fallthru
          _
      $region56: #{tpu_custom_call.1} parent=5 // pred_fallthru
        _
    $region6: #{tpu_custom_call.1} parent=1 // loop_footer
      %s24 = sadd.s32 1, %s20
    $region7: #{tpu_custom_call.1} parent=1 // loop_footer_branch
      %19 = sbr.rel target = $region3
    $region8: #{tpu_custom_call.1} parent=1 // loop_exit
      _
    %1163 = vsyncpa [#allocation3], 1
    %s1164 = scalar_lea.sflag [#allocation3], 1
    %1165 = vsyncpa %s1164, 1
    %1166 = vsyncpa [#allocation6], 1
    %s1167 = scalar_lea.sflag [#allocation6], 1
    %1168 = vsyncpa %s1167, 1
    %1169 = vsyncpa [#allocation4], 1
    %s1170 = scalar_lea.sflag [#allocation4], 1
    %1171 = vsyncpa %s1170, 1

</llo_original>
